<compile_context>
chip_gen: v7x
topology: tpu7x:2x2x1
jax: 0.10.0
libtpu: 0.0.40
codegen_flags: <defaults>
</compile_context>

<pallas_src>
import math

import jax
import jax.numpy as jnp
from jax.experimental import pallas as pl
from jax.experimental.pallas import tpu as pltpu


def _cdiv(a, b):
    return -(-a // b)


def _round_up(a, b):
    return _cdiv(a, b) * b


def _vmem_capacity_bytes():
    """Per-core VMEM capacity; conservative (v7x) fallback if the query fails."""
    try:
        info = pltpu.get_tpu_info()
        cap = getattr(info, "vmem_capacity_bytes", None)
        if cap:
            return int(cap)
    except Exception:
        pass
    return 64 * 1024 * 1024


def _make_kernel(dilation, c_out, c_out_pad, compute_dtype):
    def kernel(x_ref, h_ref, w0_ref, wcat_ref, bc_ref, br_ref, o_ref):
        # x_ref:    (C_in, TILE_L)       current length-tile (L on lanes)
        # h_ref:    (C_in, HALO_W)       128-aligned halo = start of the next tile of x
        # w0_ref:   (C_out_pad, C_in)    dilated-conv tap 0
        # wcat_ref: (2*C_out_pad, C_in)  rows [:C_out_pad] = tap 1, rows [C_out_pad:] = 1x1 res
        # bc_ref:   (C_out_pad, 1)       conv bias (f32)
        # br_ref:   (C_out_pad, 1)       residual bias (f32)
        # o_ref:    (C_out, TILE_L)      lane-dense output tile
        x0 = x_ref[...].astype(compute_dtype)
        h = h_ref[...].astype(compute_dtype)
        # shifted operand x[:, l + dilation]; tail columns come from the aligned halo fetch
        xd = jnp.concatenate([x0[:, dilation:], h[:, :dilation]], axis=1)

        # two MXU matmuls total (tap-1 conv and 1x1 residual fused into one operand)
        t0 = jnp.dot(w0_ref[...], x0, preferred_element_type=jnp.float32)
        td = jnp.dot(wcat_ref[...], xd, preferred_element_type=jnp.float32)

        conv = t0 + td[:c_out_pad, :] + bc_ref[...]
        res = td[c_out_pad:, :] + br_ref[...]
        y = jnp.maximum(conv, 0.0) + res                  # post-matmul math stays f32
        o_ref[...] = y[:c_out, :].astype(o_ref.dtype)

    return kernel


def dilated_conv_layer_1d(x_ncl, w_conv, b_conv, w_res, b_res, dilation, *,
                          tile_l=None, compute_dtype=None, out_dtype=None):
    """x_ncl: (N, C_in, L); w_conv: (C_out, C_in, 2); b_conv: (C_out,);
    w_res: (C_out, C_in, 1); b_res: (C_out,). Returns (N, C_out, L - dilation)."""
    N, C_in, L = x_ncl.shape
    C_out, _, k = w_conv.shape
    assert k == 2, "module shapes only broadcast for kernel_size == 2"
    dilation = int(dilation)
    assert 1 <= dilation < L
    L_out = L - dilation

    compute_dtype = jnp.dtype(compute_dtype if compute_dtype is not None else x_ncl.dtype)
    out_dtype = jnp.dtype(out_dtype if out_dtype is not None else x_ncl.dtype)
    c_out_pad = _round_up(C_out, 8)              # sublane-aligned row split of fused matmul

    # ---- tile-size / VMEM selection (per TPU generation) --------------------------------
    halo_w = _round_up(dilation, 128)            # lane-aligned halo width (covers the shift)
    x_bytes = jnp.dtype(x_ncl.dtype).itemsize
    cmp_bytes = compute_dtype.itemsize
    out_bytes = out_dtype.itemsize

    vmem_cap = _vmem_capacity_bytes()
    vmem_limit = max(32 << 20, min(vmem_cap - (12 << 20), 100 << 20))
    tile_budget = int(vmem_limit * 0.6)          # headroom for weights / halo bufs / temps

    # per output-column VMEM footprint: double-buffered x/out tiles, in-kernel cast +
    # shifted copy of x, and the f32 matmul results / elementwise temporaries.
    per_col = (2 * C_in * x_bytes + 2 * C_out * out_bytes
               + 2 * C_in * cmp_bytes + 6 * c_out_pad * 4)
    hi_cap = max(halo_w, (2048 // halo_w) * halo_w)

    if tile_l is None:
        tile_l = (tile_budget // max(per_col, 1)) // halo_w * halo_w
    else:
        tile_l = _round_up(int(tile_l), halo_w)
    tile_l = max(halo_w, min(tile_l, hi_cap))

    # never use tiles larger than needed; with N == 1 prefer >= 2 tiles so the "parallel"
    # tile axis can feed both v7x TensorCores.
    l_cap = _round_up(L_out, halo_w)
    if N == 1 and L_out > halo_w:
        l_cap = max(halo_w, _round_up(_cdiv(L_out, 2), halo_w))
    tile_l = max(halo_w, min(tile_l, l_cap))
    if tile_l <= dilation:                       # only possible when dilation % 128 == 0
        tile_l = _round_up(dilation + 1, halo_w)

    num_tiles = _cdiv(L_out, tile_l)
    bpt = tile_l // halo_w                       # halo blocks per length-tile
    max_hblk = (L - 1) // halo_w                 # last halo block whose start is in-bounds

    # ---- weight / bias prep (tiny arrays; PyTorch (C_out, C_in) orientation kept) -------
    def _pad_rows(w):
        return jnp.pad(w, ((0, c_out_pad - C_out), (0, 0)))

    w0 = _pad_rows(w_conv[:, :, 0]).astype(compute_dtype)                 # (C_out_pad, C_in)
    wcat = jnp.concatenate([_pad_rows(w_conv[:, :, 1]),
                            _pad_rows(w_res[:, :, 0])], axis=0).astype(compute_dtype)
    bc = jnp.pad(b_conv, (0, c_out_pad - C_out)).reshape(c_out_pad, 1).astype(jnp.float32)
    br = jnp.pad(b_res, (0, c_out_pad - C_out)).reshape(c_out_pad, 1).astype(jnp.float32)

    kernel = _make_kernel(dilation, C_out, c_out_pad, compute_dtype)

    # Halo = first halo_w columns of the next tile of x, clamped to stay in-bounds.  For the
    # final tile the clamped (wrong) halo only feeds output columns >= L_out, which Pallas
    # discards via edge-block write masking.
    def halo_map(n, j, _b=bpt, _m=max_hblk):
        return (n, 0, jnp.minimum((j + 1) * _b, _m))

    cost = pl.CostEstimate(
        flops=int(6 * N * C_out * C_in * L_out),
        transcendentals=0,
        bytes_accessed=int(N * C_in * L * x_bytes + N * C_out * L_out * out_bytes
                           + 3 * c_out_pad * C_in * cmp_bytes + 2 * c_out_pad * 4),
    )

    out = pl.pallas_call(
        kernel,
        out_shape=jax.ShapeDtypeStruct((N, C_out, L_out), out_dtype),
        grid_spec=pltpu.PrefetchScalarGridSpec(
            num_scalar_prefetch=0,
            grid=(N, num_tiles),
            in_specs=[
                pl.BlockSpec((pl.Squeezed(), C_in, tile_l), lambda n, j: (n, 0, j)),
                pl.BlockSpec((pl.Squeezed(), C_in, halo_w), halo_map),
                pl.BlockSpec((c_out_pad, C_in), lambda n, j: (0, 0)),
                pl.BlockSpec((2 * c_out_pad, C_in), lambda n, j: (0, 0)),
                pl.BlockSpec((c_out_pad, 1), lambda n, j: (0, 0)),
                pl.BlockSpec((c_out_pad, 1), lambda n, j: (0, 0)),
            ],
            out_specs=pl.BlockSpec((pl.Squeezed(), C_out, tile_l),
                                   lambda n, j: (n, 0, j)),
        ),
        compiler_params=pltpu.CompilerParams(
            dimension_semantics=("parallel", "parallel"),
            vmem_limit_bytes=int(vmem_limit),
        ),
        cost_estimate=cost,
    )(x_ncl, x_ncl, w0, wcat, bc, br)   # x passed twice: main tile view + halo view

    return out


def _reference(x_ncl, w_conv, b_conv, w_res, b_res, dilation):
    """Pure-JAX reference matching the PyTorch forward (kernel_size=2)."""
    L = x_ncl.shape[2]
    L_out = L - dilation
    x0 = x_ncl[:, :, :L_out]
    xd = x_ncl[:, :, dilation:dilation + L_out]
    conv = (jnp.einsum('ncl,oc->nol', x0, w_conv[:, :, 0])
            + jnp.einsum('ncl,oc->nol', xd, w_conv[:, :, 1])
            + b_conv[None, :, None])
    res = jnp.einsum('ncl,oc->nol', xd, w_res[:, :, 0]) + b_res[None, :, None]
    return jnp.maximum(conv, 0.0) + res


if __name__ == "__main__":
    key = jax.random.PRNGKey(0)

    def make_problem(k, N, C_in, C_out, L, kernel_size=2):
        kx, kw, kr, kb1, kb2 = jax.random.split(k, 5)
        x = jax.random.normal(kx, (N, C_in, L), dtype=jnp.float32)
        std_conv = math.sqrt(2.0 / (C_in * kernel_size))
        w_conv = std_conv * jax.random.normal(kw, (C_out, C_in, kernel_size), jnp.float32)
        b_conv = 0.1 * jax.random.normal(kb1, (C_out,), jnp.float32)
        std_res = math.sqrt(2.0 / C_in)
        w_res = std_res * jax.random.normal(kr, (C_out, C_in, 1), jnp.float32)
        b_res = 0.1 * jax.random.normal(kb2, (C_out,), jnp.float32)
        return x, w_conv, b_conv, w_res, b_res

    k1, k2 = jax.random.split(key)

    # 1) small shape: N=2, C_in=4, C_out=8, L=16, dilation=2 (single tile, tight f32 check)
    x, wc, bc, wr, br = make_problem(k1, 2, 4, 8, 16)
    ref = _reference(x, wc, bc, wr, br, 2)
    out = jax.block_until_ready(dilated_conv_layer_1d(x, wc, bc, wr, br, 2))
    assert out.shape == (2, 8, 14), out.shape
    assert jnp.allclose(out, ref, atol=1e-5, rtol=1e-5), "f32 mismatch (small shape)"

    # 2) ragged multi-tile shape exercising the real halo path and edge-block write masking
    x2, wc2, bc2, wr2, br2 = make_problem(k2, 1, 8, 16, 300)
    ref2 = _reference(x2, wc2, bc2, wr2, br2, 3)
    out2 = jax.block_until_ready(dilated_conv_layer_1d(x2, wc2, bc2, wr2, br2, 3))
    assert out2.shape == (1, 16, 297), out2.shape
    assert jnp.allclose(out2, ref2, atol=5e-4, rtol=5e-4), "f32 mismatch (ragged shape)"

    # 3) bf16 I/O path (v6e/v7x): caller supplies bf16 activations; f32 accumulation inside
    out3 = dilated_conv_layer_1d(x.astype(jnp.bfloat16), wc, bc, wr, br, 2,
                                 out_dtype=jnp.float32)
    out3 = jax.block_until_ready(out3)
    assert out3.shape == (2, 8, 14), out3.shape
    assert jnp.allclose(out3, ref, atol=5e-2, rtol=5e-2), "bf16 mismatch vs reference"

    print("KERNEL_OK")
</pallas_src>

<mosaic_0001>
module attributes {stable_mosaic.version = 11 : i64} {
  func.func @kernel(%arg0: i32, %arg1: i32, %arg2: memref<1x4x128xf32, #tpu.memory_space<vmem>>, %arg3: memref<1x4x128xf32, #tpu.memory_space<vmem>>, %arg4: memref<8x4xf32, #tpu.memory_space<vmem>>, %arg5: memref<16x4xf32, #tpu.memory_space<vmem>>, %arg6: memref<8x1xf32, #tpu.memory_space<vmem>>, %arg7: memref<8x1xf32, #tpu.memory_space<vmem>>, %arg8: memref<1x8x128xf32, #tpu.memory_space<vmem>>) attributes {dimension_semantics = [#tpu.dimension_semantics<parallel>, #tpu.dimension_semantics<parallel>], iteration_bounds = array<i64: 2, 1>, scalar_prefetch = 0 : i64, scratch_operands = 0 : i64, tpu.core_type = #tpu.core_type<tc>, window_params = [{transform_indices = @transform_0, window_bounds = array<i64: 1, 4, 128>}, {transform_indices = @transform_1, window_bounds = array<i64: 1, 4, 128>}, {pipeline_mode = #tpu.pipeline_mode<synchronous>, transform_indices = @transform_2, window_bounds = array<i64: 8, 4>}, {pipeline_mode = #tpu.pipeline_mode<synchronous>, transform_indices = @transform_3, window_bounds = array<i64: 16, 4>}, {pipeline_mode = #tpu.pipeline_mode<synchronous>, transform_indices = @transform_4, window_bounds = array<i64: 8, 1>}, {pipeline_mode = #tpu.pipeline_mode<synchronous>, transform_indices = @transform_5, window_bounds = array<i64: 8, 1>}, {transform_indices = @transform_6, window_bounds = array<i64: 1, 8, 128>}]} {
    %c0 = arith.constant 0 : index
    %c0_0 = arith.constant 0 : index
    %c0_1 = arith.constant 0 : index
    %0 = vector.load %arg2[%c0, %c0_0, %c0_1] : memref<1x4x128xf32, #tpu.memory_space<vmem>>, vector<1x4x128xf32>
    %1 = vector.shape_cast %0 : vector<1x4x128xf32> to vector<4x128xf32>
    %c0_2 = arith.constant 0 : index
    %c0_3 = arith.constant 0 : index
    %c0_4 = arith.constant 0 : index
    %2 = vector.load %arg3[%c0_2, %c0_3, %c0_4] : memref<1x4x128xf32, #tpu.memory_space<vmem>>, vector<1x4x128xf32>
    %3 = vector.shape_cast %2 : vector<1x4x128xf32> to vector<4x128xf32>
    %4 = vector.extract_strided_slice %1 {offsets = [0, 2], sizes = [4, 126], strides = [1, 1]} : vector<4x128xf32> to vector<4x126xf32>
    %5 = vector.extract_strided_slice %3 {offsets = [0, 0], sizes = [4, 2], strides = [1, 1]} : vector<4x128xf32> to vector<4x2xf32>
    %6 = tpu.concatenate %4, %5 in 1 : vector<4x126xf32>, vector<4x2xf32> -> vector<4x128xf32>
    %c0_5 = arith.constant 0 : index
    %c0_6 = arith.constant 0 : index
    %7 = vector.load %arg4[%c0_5, %c0_6] : memref<8x4xf32, #tpu.memory_space<vmem>>, vector<8x4xf32>
    %cst = arith.constant dense<0.000000e+00> : vector<8x128xf32>
    %8 = tpu.matmul %7, %1, %cst {dimension_numbers = #tpu.dot_dimension_numbers<[1], [0], [0], [1], [0, 0, 1, 1], [], []>} : vector<8x4xf32>, vector<4x128xf32>, vector<8x128xf32> -> vector<8x128xf32>
    %c0_7 = arith.constant 0 : index
    %c0_8 = arith.constant 0 : index
    %9 = vector.load %arg5[%c0_7, %c0_8] : memref<16x4xf32, #tpu.memory_space<vmem>>, vector<16x4xf32>
    %cst_9 = arith.constant dense<0.000000e+00> : vector<16x128xf32>
    %10 = tpu.matmul %9, %6, %cst_9 {dimension_numbers = #tpu.dot_dimension_numbers<[1], [0], [0], [1], [0, 0, 1, 1], [], []>} : vector<16x4xf32>, vector<4x128xf32>, vector<16x128xf32> -> vector<16x128xf32>
    %11 = vector.extract_strided_slice %10 {offsets = [0, 0], sizes = [8, 128], strides = [1, 1]} : vector<16x128xf32> to vector<8x128xf32>
    %12 = arith.addf %8, %11 : vector<8x128xf32>
    %c0_10 = arith.constant 0 : index
    %c0_11 = arith.constant 0 : index
    %13 = vector.load %arg6[%c0_10, %c0_11] : memref<8x1xf32, #tpu.memory_space<vmem>>, vector<8x1xf32>
    %14 = vector.broadcast %13 : vector<8x1xf32> to vector<8x128xf32>
    %15 = arith.addf %12, %14 : vector<8x128xf32>
    %16 = vector.extract_strided_slice %10 {offsets = [8, 0], sizes = [8, 128], strides = [1, 1]} : vector<16x128xf32> to vector<8x128xf32>
    %c0_12 = arith.constant 0 : index
    %c0_13 = arith.constant 0 : index
    %17 = vector.load %arg7[%c0_12, %c0_13] : memref<8x1xf32, #tpu.memory_space<vmem>>, vector<8x1xf32>
    %18 = vector.broadcast %17 : vector<8x1xf32> to vector<8x128xf32>
    %19 = arith.addf %16, %18 : vector<8x128xf32>
    %cst_14 = arith.constant 0.000000e+00 : f32
    %20 = vector.broadcast %cst_14 : f32 to vector<8x128xf32>
    %21 = arith.maximumf %15, %20 : vector<8x128xf32>
    %22 = arith.addf %21, %19 : vector<8x128xf32>
    %c0_15 = arith.constant 0 : index
    %c0_16 = arith.constant 0 : index
    %c0_17 = arith.constant 0 : index
    %23 = vector.load %arg8[%c0_15, %c0_16, %c0_17] : memref<1x8x128xf32, #tpu.memory_space<vmem>>, vector<1x8x128xf32>
    %24 = vector.shape_cast %23 : vector<1x8x128xf32> to vector<8x128xf32>
    %25 = vector.shape_cast %22 : vector<8x128xf32> to vector<1x8x128xf32>
    tpu.vector_store %arg8[%c0_15, %c0_16, %c0_17], %25 {strides = array<i32>} : memref<1x8x128xf32, #tpu.memory_space<vmem>>, vector<1x8x128xf32>,
    return
  }
  func.func @transform_0(%arg0: i32, %arg1: i32) -> (i32, i32, i32) {
    %c0_i32 = arith.constant 0 : i32
    %c0_i32_0 = arith.constant 0 : i32
    return %arg0, %c0_i32, %arg1 : i32, i32, i32
  }
  func.func @transform_1(%arg0: i32, %arg1: i32) -> (i32, i32, i32) {
    %c1_i32 = arith.constant 1 : i32
    %0 = arith.addi %arg1, %c1_i32 : i32
    %c1_i32_0 = arith.constant 1 : i32
    %1 = arith.muli %0, %c1_i32_0 : i32
    %c0_i32 = arith.constant 0 : i32
    %2 = arith.minsi %1, %c0_i32 : i32
    %c0_i32_1 = arith.constant 0 : i32
    %c0_i32_2 = arith.constant 0 : i32
    return %arg0, %c0_i32_1, %2 : i32, i32, i32
  }
  func.func @transform_2(%arg0: i32, %arg1: i32) -> (i32, i32) {
    %c0_i32 = arith.constant 0 : i32
    %c0_i32_0 = arith.constant 0 : i32
    %c0_i32_1 = arith.constant 0 : i32
    return %c0_i32, %c0_i32_0 : i32, i32
  }
  func.func @transform_3(%arg0: i32, %arg1: i32) -> (i32, i32) {
    %c0_i32 = arith.constant 0 : i32
    %c0_i32_0 = arith.constant 0 : i32
    %c0_i32_1 = arith.constant 0 : i32
    return %c0_i32, %c0_i32_0 : i32, i32
  }
  func.func @transform_4(%arg0: i32, %arg1: i32) -> (i32, i32) {
    %c0_i32 = arith.constant 0 : i32
    %c0_i32_0 = arith.constant 0 : i32
    %c0_i32_1 = arith.constant 0 : i32
    return %c0_i32, %c0_i32_0 : i32, i32
  }
  func.func @transform_5(%arg0: i32, %arg1: i32) -> (i32, i32) {
    %c0_i32 = arith.constant 0 : i32
    %c0_i32_0 = arith.constant 0 : i32
    %c0_i32_1 = arith.constant 0 : i32
    return %c0_i32, %c0_i32_0 : i32, i32
  }
  func.func @transform_6(%arg0: i32, %arg1: i32) -> (i32, i32, i32) {
    %c0_i32 = arith.constant 0 : i32
    %c0_i32_0 = arith.constant 0 : i32
    return %arg0, %c0_i32, %arg1 : i32, i32, i32
  }
}

</mosaic_0001>

<llo_original>
// kernel: tpu_custom_call.1
$region0: #{tpu_custom_call.1}
  #allocation0 [shape = 'u32[]', space=smem, size = 0x4, offset = 0x4, fixed_abs, tag = 'smem constant byte address 0x4 - core index']
  #allocation1 [shape = 'u32[144,128]{1,0:T(1,128)}', space=vmem, size = 0x12000, scoped, tag = 'internal scratch']
  %s0 = inlined_call_operand.vmem [shape: f32[2,4,16], index: 0, kind: input, shape index: {}]
  %s1 = inlined_call_operand.vmem [shape: f32[2,4,16], index: 1, kind: input, shape index: {}]
  %s2 = inlined_call_operand.vmem [shape: f32[8,4], index: 2, kind: input, shape index: {}]
  %s3 = inlined_call_operand.vmem [shape: f32[16,4], index: 3, kind: input, shape index: {}]
  %s4 = inlined_call_operand.vmem [shape: f32[8,1], index: 4, kind: input, shape index: {}]
  %s5 = inlined_call_operand.vmem [shape: f32[8,1], index: 5, kind: input, shape index: {}]
  %s6 = inlined_call_operand.hbm [shape: f32[2,8,14], index: 6, kind: output, shape index: {}]
  %s7 = sld [smem:[#allocation0]]
  $region57: #{tpu_custom_call.1} parent=0
    _
  %s9 = ssub.s32 1, %s7
  %s10 = scalar_select 0, %s9, %s7
  $region1: #{tpu_custom_call.1} parent=0
    #allocation2 [shape = 'u8[8192]{0}', space=vmem, size = 0x2000, scoped, tag = 'output window, operand 0']
    #allocation3 [shape = 's32[2]{0}', space=sflag, size = 0x8, scoped, tag = 'scoped memory for tpu_custom_call.1']
    %11 = vsyncpa [#allocation3], 0
    %s12 = scalar_lea.sflag [#allocation3], 1
    %13 = vsyncpa %s12, 0
    loop: start=0, step=1, limit=4
    $region2: #{tpu_custom_call.1} parent=1 // loop_pre_header
      _
    $region3: #{tpu_custom_call.1} parent=1 // loop_header
      %s15 = sphi 0, %s19
      %p16 = scmp.ge.s32.totalorder %s15, 4
      %s22 = sphi 0, %s34
      %s23 = sphi 0, %s30
      %s24 = sphi 0, %s22
      %s25 = sphi 0, %s23
      %s26 = sphi 0, %s24
      %s27 = sphi 0, %s25
      %s39 = sphi 0, %s41
      %s42 = sphi 0, %s39
      %s43 = sphi 0, %s42
      %s59 = sphi 0, %s43
      %s73 = sphi 0, %s75
      %s76 = sphi 0, %s73
      %s77 = sphi 0, %s76
      %s93 = sphi 0, %s77
      %s97 = sphi 0, %s97
      %s99 = sphi 0, %s97
      %s100 = sphi 0, %s99
      %s114 = sphi 0, %s100
      %s118 = sphi 0, %s118
      %s120 = sphi 0, %s118
      %s121 = sphi 0, %s120
      %s135 = sphi 0, %s121
      %s139 = sphi 0, %s139
      %s141 = sphi 0, %s139
      %s142 = sphi 0, %s141
      %s156 = sphi 0, %s142
      %s160 = sphi 0, %s160
      %s162 = sphi 0, %s160
      %s163 = sphi 0, %s162
      %s177 = sphi 0, %s163
      %s185 = sphi 0, %s187
      %s188 = sphi 0, %s185
      %s189 = sphi 0, %s188
      %s205 = sphi 0, %s189
    $region4: #{tpu_custom_call.1} parent=1 // loop_header_branch
      %18 = sbr.rel (%p16) target = $region8
    $region5: #{tpu_custom_call.1} parent=1 // loop_body
      %s20 = ssub.s32 %s15, 1
      %s21 = ssub.s32 %s15, 2
      %s28 = sadd.s32 1, %s23
      %p29 = scmp.ge.s32.totalorder %s28, 1
      %s30 = scalar_select %p29, 0, %s28
      %s31 = sadd.s32 1, %s22
      %s32 = scalar_select %p29, %s31, %s22
      %p33 = scmp.ge.s32.totalorder %s32, 2
      %s34 = scalar_select %p33, 0, %s32
      %s35 = ssub.s32 %s22, %s34
      %s36 = ssub.s32 %s23, %s30
      %s37 = sor.u32 %s35, %s36
      %p38 = scmp.eq.s32.totalorder %s37, 0
      %s40 = sadd.s32 %s39, 1
      %s41 = scalar_select %p38, %s39, %s40
      %p44 = pneg %p38
      %p45 = scmp.eq.s32.totalorder %s15, 1
      %p46 = por %p44, %p45
      %p47 = scmp.ne.s32.totalorder %s39, %s42
      %p48 = scmp.eq.s32.totalorder %s15, 0
      %p49 = por %p47, %p48
      %p50 = scmp.ne.s32.totalorder %s39, %s42
      %p51 = scmp.eq.s32.totalorder %s20, 1
      %p52 = por %p50, %p51
      %p53 = scmp.ne.s32.totalorder %s42, %s43
      %p54 = scmp.eq.s32.totalorder %s20, 0
      %p55 = por %p53, %p54
      %p56 = scmp.ne.s32.totalorder %s42, %s43
      %p57 = scmp.eq.s32.totalorder %s21, 1
      %p58 = por %p56, %p57
      %p60 = scmp.ne.s32.totalorder %s43, %s59
      %p61 = scmp.eq.s32.totalorder %s21, 0
      %p62 = por %p60, %p61
      %s63 = sadd.s32 %s23, 1
      %p64 = scmp.lt.s32.totalorder %s63, 0
      %s65 = scalar_select %p64, %s63, 0
      %s66 = sadd.s32 %s30, 1
      %p67 = scmp.lt.s32.totalorder %s66, 0
      %s68 = scalar_select %p67, %s66, 0
      %s69 = ssub.s32 %s22, %s34
      %s70 = ssub.s32 %s65, %s68
      %s71 = sor.u32 %s69, %s70
      %p72 = scmp.eq.s32.totalorder %s71, 0
      %s74 = sadd.s32 %s73, 1
      %s75 = scalar_select %p72, %s73, %s74
      %p78 = pneg %p72
      %p79 = scmp.eq.s32.totalorder %s15, 1
      %p80 = por %p78, %p79
      %p81 = scmp.ne.s32.totalorder %s73, %s76
      %p82 = scmp.eq.s32.totalorder %s15, 0
      %p83 = por %p81, %p82
      %p84 = scmp.ne.s32.totalorder %s73, %s76
      %p85 = scmp.eq.s32.totalorder %s20, 1
      %p86 = por %p84, %p85
      %p87 = scmp.ne.s32.totalorder %s76, %s77
      %p88 = scmp.eq.s32.totalorder %s20, 0
      %p89 = por %p87, %p88
      %p90 = scmp.ne.s32.totalorder %s76, %s77
      %p91 = scmp.eq.s32.totalorder %s21, 1
      %p92 = por %p90, %p91
      %p94 = scmp.ne.s32.totalorder %s77, %s93
      %p95 = scmp.eq.s32.totalorder %s21, 0
      %p96 = por %p94, %p95
      %s98 = sadd.s32 %s97, 1
      %p101 = scmp.eq.s32.totalorder %s15, 1
      %p102 = scmp.ne.s32.totalorder %s97, %s99
      %p103 = scmp.eq.s32.totalorder %s15, 0
      %p104 = por %p102, %p103
      %p105 = scmp.ne.s32.totalorder %s97, %s99
      %p106 = scmp.eq.s32.totalorder %s20, 1
      %p107 = por %p105, %p106
      %p108 = scmp.ne.s32.totalorder %s99, %s100
      %p109 = scmp.eq.s32.totalorder %s20, 0
      %p110 = por %p108, %p109
      %p111 = scmp.ne.s32.totalorder %s99, %s100
      %p112 = scmp.eq.s32.totalorder %s21, 1
      %p113 = por %p111, %p112
      %p115 = scmp.ne.s32.totalorder %s100, %s114
      %p116 = scmp.eq.s32.totalorder %s21, 0
      %p117 = por %p115, %p116
      %s119 = sadd.s32 %s118, 1
      %p122 = scmp.eq.s32.totalorder %s15, 1
      %p123 = scmp.ne.s32.totalorder %s118, %s120
      %p124 = scmp.eq.s32.totalorder %s15, 0
      %p125 = por %p123, %p124
      %p126 = scmp.ne.s32.totalorder %s118, %s120
      %p127 = scmp.eq.s32.totalorder %s20, 1
      %p128 = por %p126, %p127
      %p129 = scmp.ne.s32.totalorder %s120, %s121
      %p130 = scmp.eq.s32.totalorder %s20, 0
      %p131 = por %p129, %p130
      %p132 = scmp.ne.s32.totalorder %s120, %s121
      %p133 = scmp.eq.s32.totalorder %s21, 1
      %p134 = por %p132, %p133
      %p136 = scmp.ne.s32.totalorder %s121, %s135
      %p137 = scmp.eq.s32.totalorder %s21, 0
      %p138 = por %p136, %p137
      %s140 = sadd.s32 %s139, 1
      %p143 = scmp.eq.s32.totalorder %s15, 1
      %p144 = scmp.ne.s32.totalorder %s139, %s141
      %p145 = scmp.eq.s32.totalorder %s15, 0
      %p146 = por %p144, %p145
      %p147 = scmp.ne.s32.totalorder %s139, %s141
      %p148 = scmp.eq.s32.totalorder %s20, 1
      %p149 = por %p147, %p148
      %p150 = scmp.ne.s32.totalorder %s141, %s142
      %p151 = scmp.eq.s32.totalorder %s20, 0
      %p152 = por %p150, %p151
      %p153 = scmp.ne.s32.totalorder %s141, %s142
      %p154 = scmp.eq.s32.totalorder %s21, 1
      %p155 = por %p153, %p154
      %p157 = scmp.ne.s32.totalorder %s142, %s156
      %p158 = scmp.eq.s32.totalorder %s21, 0
      %p159 = por %p157, %p158
      %s161 = sadd.s32 %s160, 1
      %p164 = scmp.eq.s32.totalorder %s15, 1
      %p165 = scmp.ne.s32.totalorder %s160, %s162
      %p166 = scmp.eq.s32.totalorder %s15, 0
      %p167 = por %p165, %p166
      %p168 = scmp.ne.s32.totalorder %s160, %s162
      %p169 = scmp.eq.s32.totalorder %s20, 1
      %p170 = por %p168, %p169
      %p171 = scmp.ne.s32.totalorder %s162, %s163
      %p172 = scmp.eq.s32.totalorder %s20, 0
      %p173 = por %p171, %p172
      %p174 = scmp.ne.s32.totalorder %s162, %s163
      %p175 = scmp.eq.s32.totalorder %s21, 1
      %p176 = por %p174, %p175
      %p178 = scmp.ne.s32.totalorder %s163, %s177
      %p179 = scmp.eq.s32.totalorder %s21, 0
      %p180 = por %p178, %p179
      %s181 = ssub.s32 %s22, %s34
      %s182 = ssub.s32 %s23, %s30
      %s183 = sor.u32 %s181, %s182
      %p184 = scmp.eq.s32.totalorder %s183, 0
      %s186 = sadd.s32 %s185, 1
      %s187 = scalar_select %p184, %s185, %s186
      %p190 = pneg %p184
      %p191 = scmp.eq.s32.totalorder %s15, 1
      %p192 = por %p190, %p191
      %p193 = scmp.ne.s32.totalorder %s185, %s188
      %p194 = scmp.eq.s32.totalorder %s15, 0
      %p195 = por %p193, %p194
      %p196 = scmp.ne.s32.totalorder %s185, %s188
      %p197 = scmp.eq.s32.totalorder %s20, 1
      %p198 = por %p196, %p197
      %p199 = scmp.ne.s32.totalorder %s188, %s189
      %p200 = scmp.eq.s32.totalorder %s20, 0
      %p201 = por %p199, %p200
      %p202 = scmp.ne.s32.totalorder %s188, %s189
      %p203 = scmp.eq.s32.totalorder %s21, 1
      %p204 = por %p202, %p203
      %p206 = scmp.ne.s32.totalorder %s189, %s205
      %p207 = scmp.eq.s32.totalorder %s21, 0
      %p208 = por %p206, %p207
      %p209 = scmp.le.s32.totalorder 1, %s15
      %p210 = scmp.lt.s32.totalorder %s15, 3
      %p211 = pnand %p209, %p210
      %p212 = pneg %p211
      // Predicated region
      $region9: #{tpu_custom_call.1} parent=5 // pred_check
        _
      $region10: #{tpu_custom_call.1} parent=5 // pred_check_branch
        %214 = sbr.rel (%p211) target = $region12
      $region11: #{tpu_custom_call.1} parent=5 // pred_region
        %s215 = ssub.s32 %s15, 1
        // Predicated region
        $region13: #{tpu_custom_call.1} parent=11 // pred_check
          %p216 = pneg %p110
        $region14: #{tpu_custom_call.1} parent=11 // pred_check_branch
          %218 = sbr.rel (%p216) target = $region16
        $region15: #{tpu_custom_call.1} parent=11 // pred_region
          _
        $region16: #{tpu_custom_call.1} parent=11 // pred_fallthru
          _
        // Predicated region
        $region17: #{tpu_custom_call.1} parent=11 // pred_check
          %p219 = pneg %p131
        $region18: #{tpu_custom_call.1} parent=11 // pred_check_branch
          %221 = sbr.rel (%p219) target = $region20
        $region19: #{tpu_custom_call.1} parent=11 // pred_region
          _
        $region20: #{tpu_custom_call.1} parent=11 // pred_fallthru
          _
        // Predicated region
        $region21: #{tpu_custom_call.1} parent=11 // pred_check
          %p222 = pneg %p152
        $region22: #{tpu_custom_call.1} parent=11 // pred_check_branch
          %224 = sbr.rel (%p222) target = $region24
        $region23: #{tpu_custom_call.1} parent=11 // pred_region
          _
        $region24: #{tpu_custom_call.1} parent=11 // pred_fallthru
          _
        // Predicated region
        $region25: #{tpu_custom_call.1} parent=11 // pred_check
          %p225 = pneg %p173
        $region26: #{tpu_custom_call.1} parent=11 // pred_check_branch
          %227 = sbr.rel (%p225) target = $region28
        $region27: #{tpu_custom_call.1} parent=11 // pred_region
          _
        $region28: #{tpu_custom_call.1} parent=11 // pred_fallthru
          _
      $region12: #{tpu_custom_call.1} parent=5 // pred_fallthru
        _
      %p228 = scmp.lt.s32.totalorder %s15, 2
      // Predicated region
      $region29: #{tpu_custom_call.1} parent=5 // pred_check
        %p229 = pneg %p228
      $region30: #{tpu_custom_call.1} parent=5 // pred_check_branch
        %231 = sbr.rel (%p229) target = $region32
      $region31: #{tpu_custom_call.1} parent=5 // pred_region
        // Predicated region
        $region33: #{tpu_custom_call.1} parent=31 // pred_check
          %p232 = pneg %p49
        $region34: #{tpu_custom_call.1} parent=31 // pred_check_branch
          %234 = sbr.rel (%p232) target = $region36
        $region35: #{tpu_custom_call.1} parent=31 // pred_region
          %p235 = scmp.lt.s32.totalorder %s22, 1
          %s236 = scalar_select %p235, %s22, 1
          %p237 = scmp.lt.s32.totalorder %s23, 0
          %s238 = scalar_select %p237, %s23, 0
          %s239 = sadd.s32 %s238, %s236
          %s240 = smul.addr %s239, 4
          %s241 = scalar_lea.vmem %s0, %s240
        $region36: #{tpu_custom_call.1} parent=31 // pred_fallthru
          _
        // Predicated region
        $region37: #{tpu_custom_call.1} parent=31 // pred_check
          %p242 = pneg %p83
        $region38: #{tpu_custom_call.1} parent=31 // pred_check_branch
          %244 = sbr.rel (%p242) target = $region40
        $region39: #{tpu_custom_call.1} parent=31 // pred_region
          %s245 = sadd.s32 %s23, 1
          %p246 = scmp.lt.s32.totalorder %s245, 0
          %s247 = scalar_select %p246, %s245, 0
          %p248 = scmp.lt.s32.totalorder %s22, 1
          %s249 = scalar_select %p248, %s22, 1
          %p250 = scmp.lt.s32.totalorder %s247, 0
          %s251 = scalar_select %p250, %s247, 0
          %s252 = sadd.s32 %s251, %s249
          %s253 = smul.addr %s252, 4
          %s254 = scalar_lea.vmem %s1, %s253
          %s255 = sadd.s32 %s23, 1
          %p256 = scmp.lt.s32.totalorder %s255, 0
          %s257 = scalar_select %p256, %s255, 0
        $region40: #{tpu_custom_call.1} parent=31 // pred_fallthru
          _
      $region32: #{tpu_custom_call.1} parent=5 // pred_fallthru
        _
      %p258 = scmp.le.s32.totalorder 1, %s15
      %p259 = scmp.lt.s32.totalorder %s15, 3
      %p260 = pnand %p258, %p259
      %p261 = pneg %p260
      // Predicated region
      $region41: #{tpu_custom_call.1} parent=5 // pred_check
        _
      $region42: #{tpu_custom_call.1} parent=5 // pred_check_branch
        %263 = sbr.rel (%p260) target = $region44
      $region43: #{tpu_custom_call.1} parent=5 // pred_region
        %s264 = ssub.s32 %s15, 1
        %p265 = scmp.lt.s32.totalorder %s24, 1
        %s266 = scalar_select %p265, %s24, 1
        %p267 = scmp.lt.s32.totalorder %s25, 0
        %s268 = scalar_select %p267, %s25, 0
        %s269 = sadd.s32 %s268, %s266
        %s270 = smul.addr %s269, 4
        %s271 = scalar_lea.vmem %s0, %s270
        %p272 = pneg %p55
        %p273 = pneg %p52
        %s274 = sadd.s32 %s25, 1
        %p275 = scmp.lt.s32.totalorder %s274, 0
        %s276 = scalar_select %p275, %s274, 0
        %p277 = scmp.lt.s32.totalorder %s24, 1
        %s278 = scalar_select %p277, %s24, 1
        %p279 = scmp.lt.s32.totalorder %s276, 0
        %s280 = scalar_select %p279, %s276, 0
        %s281 = sadd.s32 %s280, %s278
        %s282 = smul.addr %s281, 4
        %s283 = scalar_lea.vmem %s1, %s282
        %p284 = pneg %p89
        %p285 = pneg %p86
        %p286 = pneg %p110
        %p287 = pneg %p107
        %p288 = pneg %p131
        %p289 = pneg %p128
        %p290 = pneg %p152
        %p291 = pneg %p149
        %p292 = pneg %p173
        %p293 = pneg %p170
        %p294 = pneg %p201
        %p295 = pneg %p198
        %s296 = sand.u32 %s188, 1
        %s297 = scalar_lea.sflag [#allocation3], %s296
        %s298 = sand.u32 %s188, 1
        %s299 = smul.addr %s298, 8
        %s300 = scalar_lea.vmem [#allocation2], %s299
        %p301 = scmp.lt.s32.totalorder %s24, 1
        %s302 = scalar_select %p301, %s24, 1
        %p303 = scmp.lt.s32.totalorder %s25, 0
        %s304 = scalar_select %p303, %s25, 0
        %s305 = sadd.s32 %s304, %s302
        %s306 = smul.addr %s305, 4
        %s307 = scalar_lea.vmem %s0, %s306
        %s308 = sadd.s32 %s25, 1
        %p309 = scmp.lt.s32.totalorder %s308, 0
        %s310 = scalar_select %p309, %s308, 0
        %p311 = scmp.lt.s32.totalorder %s24, 1
        %s312 = scalar_select %p311, %s24, 1
        %p313 = scmp.lt.s32.totalorder %s310, 0
        %s314 = scalar_select %p313, %s310, 0
        %s315 = sadd.s32 %s314, %s312
        %s316 = smul.addr %s315, 4
        %s317 = scalar_lea.vmem %s1, %s316
        %s318 = sadd.s32 %s25, 1
        %p319 = scmp.lt.s32.totalorder %s318, 0
        %s320 = scalar_select %p319, %s318, 0
        %v321 = vld [vmem:[%s307] sm:$0xf]
        %v322 = vld [vmem:[%s317] sm:$0xf]
        %324 = vrot.lane.b32.xlu0 %v321, 126
        %v325 = vpop.permute.xlu0 %324
        %328 = vrot.lane.b32.xlu0 %v322, 126
        %v329 = vpop.permute.xlu0 %328
        %vm331 = vcmask 1031168
        %v332 = vsel %vm331, %v325, %v329
        %v333 = vld [vmem:[%s2] sm:$0xff]
        %v334 = vld [vmem:[%s3] sm:$0xff]
        %v335 = vld [vmem:[%s3 + $0x8] sm:$0xff]
        %vm336 = vcmask 31744
        %v338 = vsel %vm336, %v334, 0
        %v341 = vsel %vm336, %v335, 0
        %vm343 = vcmask 1043456
        %v345 = vsel %vm343, %v332, 0
        %347 = vmatprep.subr.mxu0 0.0
        %348 = vmatpush1.msra.mxu0 %v345
        %349 = vmatprep.subr.mxu0 0.0
        %350 = vmatpush1.msra.mxu0 0.0
        %351 = vmatprep.subr.mxu0 0.0
        %352 = vmatpush1.msra.mxu0 0.0
        %353 = vmatprep.subr.mxu0 0.0
        %354 = vmatpush1.msra.mxu0 0.0
        %355 = vmatprep.subr.mxu0 0.0
        %356 = vmatpush1.msra.mxu0 0.0
        %357 = vmatprep.subr.mxu0 0.0
        %358 = vmatpush1.msra.mxu0 0.0
        %359 = vmatprep.subr.mxu0 0.0
        %360 = vmatpush1.msra.mxu0 0.0
        %361 = vmatprep.subr.mxu0 0.0
        %362 = vmatpush1.msra.mxu0 0.0
        %363 = vmatprep.subr.mxu0 0.0
        %364 = vmatpush1.msra.mxu0 0.0
        %365 = vmatprep.subr.mxu0 0.0
        %366 = vmatpush1.msra.mxu0 0.0
        %367 = vmatprep.subr.mxu0 0.0
        %368 = vmatpush1.msra.mxu0 0.0
        %369 = vmatprep.subr.mxu0 0.0
        %370 = vmatpush1.msra.mxu0 0.0
        %371 = vmatprep.subr.mxu0 0.0
        %372 = vmatpush1.msra.mxu0 0.0
        %373 = vmatprep.subr.mxu0 0.0
        %374 = vmatpush1.msra.mxu0 0.0
        %375 = vmatprep.subr.mxu0 0.0
        %376 = vmatpush1.msra.mxu0 0.0
        %377 = vmatprep.subr.mxu0 0.0
        %378 = vmatpush1.msra.mxu0 0.0
        %379 = vmatprep.subr.mxu0 0.0
        %380 = vmatpush1.msra.mxu0 0.0
        %381 = vmatprep.subr.mxu0 0.0
        %382 = vmatpush1.msra.mxu0 0.0
        %383 = vmatprep.subr.mxu0 0.0
        %384 = vmatpush1.msra.mxu0 0.0
        %385 = vmatprep.subr.mxu0 0.0
        %386 = vmatpush1.msra.mxu0 0.0
        %387 = vmatprep.subr.mxu0 0.0
        %388 = vmatpush1.msra.mxu0 0.0
        %389 = vmatprep.subr.mxu0 0.0
        %390 = vmatpush1.msra.mxu0 0.0
        %391 = vmatprep.subr.mxu0 0.0
        %392 = vmatpush1.msra.mxu0 0.0
        %393 = vmatprep.subr.mxu0 0.0
        %394 = vmatpush1.msra.mxu0 0.0
        %395 = vmatprep.subr.mxu0 0.0
        %396 = vmatpush1.msra.mxu0 0.0
        %397 = vmatprep.subr.mxu0 0.0
        %398 = vmatpush1.msra.mxu0 0.0
        %399 = vmatprep.subr.mxu0 0.0
        %400 = vmatpush1.msra.mxu0 0.0
        %401 = vmatprep.subr.mxu0 0.0
        %402 = vmatpush1.msra.mxu0 0.0
        %403 = vmatprep.subr.mxu0 0.0
        %404 = vmatpush1.msra.mxu0 0.0
        %405 = vmatprep.subr.mxu0 0.0
        %406 = vmatpush1.msra.mxu0 0.0
        %407 = vmatprep.subr.mxu0 0.0
        %408 = vmatpush1.msra.mxu0 0.0
        %409 = vmatprep.subr.mxu0 0.0
        %410 = vmatpush1.msra.mxu0 0.0
        %411 = vmatprep.mubr.f32.mxu0 0.0
        %412 = vmatmul.mubr.f32.gmra.mrb[0].mxu0 %v338
        %v413 = vpop.f32.mrb[0].mxu0
        %v414 = vadd.f32 0.0, %v413
        %v415 = vpop.f32.mrb[0].mxu0
        %416 = vmatprep.mubr.f32.mxu0 0.0
        %417 = vmatmul.mubr.f32.gmra.mrb[0].mxu0 %v341
        %v418 = vpop.f32.mrb[0].mxu0
        %v419 = vadd.f32 0.0, %v418
        %v420 = vpop.f32.mrb[0].mxu0
        %421 = vdwg.mxu0
        %v423 = vsel %vm336, %v333, 0
        %v425 = vsel %vm343, %v321, 0
        %427 = vmatprep.subr.mxu0 0.0
        %428 = vmatpush1.msra.mxu0 %v425
        %429 = vmatprep.subr.mxu0 0.0
        %430 = vmatpush1.msra.mxu0 0.0
        %431 = vmatprep.subr.mxu0 0.0
        %432 = vmatpush1.msra.mxu0 0.0
        %433 = vmatprep.subr.mxu0 0.0
        %434 = vmatpush1.msra.mxu0 0.0
        %435 = vmatprep.subr.mxu0 0.0
        %436 = vmatpush1.msra.mxu0 0.0
        %437 = vmatprep.subr.mxu0 0.0
        %438 = vmatpush1.msra.mxu0 0.0
        %439 = vmatprep.subr.mxu0 0.0
        %440 = vmatpush1.msra.mxu0 0.0
        %441 = vmatprep.subr.mxu0 0.0
        %442 = vmatpush1.msra.mxu0 0.0
        %443 = vmatprep.subr.mxu0 0.0
        %444 = vmatpush1.msra.mxu0 0.0
        %445 = vmatprep.subr.mxu0 0.0
        %446 = vmatpush1.msra.mxu0 0.0
        %447 = vmatprep.subr.mxu0 0.0
        %448 = vmatpush1.msra.mxu0 0.0
        %449 = vmatprep.subr.mxu0 0.0
        %450 = vmatpush1.msra.mxu0 0.0
        %451 = vmatprep.subr.mxu0 0.0
        %452 = vmatpush1.msra.mxu0 0.0
        %453 = vmatprep.subr.mxu0 0.0
        %454 = vmatpush1.msra.mxu0 0.0
        %455 = vmatprep.subr.mxu0 0.0
        %456 = vmatpush1.msra.mxu0 0.0
        %457 = vmatprep.subr.mxu0 0.0
        %458 = vmatpush1.msra.mxu0 0.0
        %459 = vmatprep.subr.mxu0 0.0
        %460 = vmatpush1.msra.mxu0 0.0
        %461 = vmatprep.subr.mxu0 0.0
        %462 = vmatpush1.msra.mxu0 0.0
        %463 = vmatprep.subr.mxu0 0.0
        %464 = vmatpush1.msra.mxu0 0.0
        %465 = vmatprep.subr.mxu0 0.0
        %466 = vmatpush1.msra.mxu0 0.0
        %467 = vmatprep.subr.mxu0 0.0
        %468 = vmatpush1.msra.mxu0 0.0
        %469 = vmatprep.subr.mxu0 0.0
        %470 = vmatpush1.msra.mxu0 0.0
        %471 = vmatprep.subr.mxu0 0.0
        %472 = vmatpush1.msra.mxu0 0.0
        %473 = vmatprep.subr.mxu0 0.0
        %474 = vmatpush1.msra.mxu0 0.0
        %475 = vmatprep.subr.mxu0 0.0
        %476 = vmatpush1.msra.mxu0 0.0
        %477 = vmatprep.subr.mxu0 0.0
        %478 = vmatpush1.msra.mxu0 0.0
        %479 = vmatprep.subr.mxu0 0.0
        %480 = vmatpush1.msra.mxu0 0.0
        %481 = vmatprep.subr.mxu0 0.0
        %482 = vmatpush1.msra.mxu0 0.0
        %483 = vmatprep.subr.mxu0 0.0
        %484 = vmatpush1.msra.mxu0 0.0
        %485 = vmatprep.subr.mxu0 0.0
        %486 = vmatpush1.msra.mxu0 0.0
        %487 = vmatprep.subr.mxu0 0.0
        %488 = vmatpush1.msra.mxu0 0.0
        %489 = vmatprep.subr.mxu0 0.0
        %490 = vmatpush1.msra.mxu0 0.0
        %491 = vmatprep.mubr.f32.mxu0 0.0
        %492 = vmatmul.mubr.f32.gmra.mrb[0].mxu0 %v423
        %v493 = vpop.f32.mrb[0].mxu0
        %v494 = vadd.f32 %v414, %v493
        %v495 = vpop.f32.mrb[0].mxu0
        %496 = vdwg.mxu0
        %v497 = vld [vmem:[%s4] sm:$0xff]
        %499 = vset.pattern.permute.xlu0 0
        %500 = vperm.xlu0 %499, %v497
        %v501 = vpop.permute.xlu0 %500
        %v503 = vadd.f32 %v494, %v501
        %v504 = vld [vmem:[%s5] sm:$0xff]
        %506 = vset.pattern.permute.xlu0 0
        %507 = vperm.xlu0 %506, %v504
        %v508 = vpop.permute.xlu0 %507
        %v510 = vadd.f32 %v419, %v508
        %v511 = vmax.f32 %v503, 0.0
        %v512 = vadd.f32 %v511, %v510
        %513 = vst [vmem:[%s300] sm:$0xff] %v512
        %s514 = sand.u32 %s188, 1
        %s515 = scalar_lea.sflag [#allocation3], %s514
        %s516 = sand.u32 %s188, 1
        %s517 = smul.addr %s516, 8
        %s518 = scalar_lea.vmem [#allocation2], %s517
        // Predicated region
        $region45: #{tpu_custom_call.1} parent=43 // pred_check
          %p519 = pneg %p198
        $region46: #{tpu_custom_call.1} parent=43 // pred_check_branch
          %521 = sbr.rel (%p519) target = $region48
        $region47: #{tpu_custom_call.1} parent=43 // pred_region
          %s523 = ssub.s32 128, 128
          %524 = vsyncadd %s515, %s523
          %s525 = sadd.s32 %s25, %s24
          %s526 = smul.addr %s525, 128
          %s527 = scalar_lea.hbm %s6, %s526
          %s529 = sshll.u32 %s518, 4
          %s530 = int_to_ptr.vmem [resolvable:$true] %s529
          %532 = dma.vmem_to_hbm [thread:$0]  %s530, 128, %s527, %s515
        $region48: #{tpu_custom_call.1} parent=43 // pred_fallthru
          _
      $region44: #{tpu_custom_call.1} parent=5 // pred_fallthru
        _
      %p533 = scmp.le.s32.totalorder 2, %s15
      // Predicated region
      $region49: #{tpu_custom_call.1} parent=5 // pred_check
        %p534 = pneg %p533
      $region50: #{tpu_custom_call.1} parent=5 // pred_check_branch
        %536 = sbr.rel (%p534) target = $region52
      $region51: #{tpu_custom_call.1} parent=5 // pred_region
        %s537 = ssub.s32 %s15, 2
        // Predicated region
        $region53: #{tpu_custom_call.1} parent=51 // pred_check
          %p538 = pneg %p204
        $region54: #{tpu_custom_call.1} parent=51 // pred_check_branch
          %540 = sbr.rel (%p538) target = $region56
        $region55: #{tpu_custom_call.1} parent=51 // pred_region
          %s541 = sand.u32 %s189, 1
          %s542 = scalar_lea.sflag [#allocation3], %s541
          %s543 = sand.u32 %s189, 1
          %s544 = smul.addr %s543, 8
          %s545 = scalar_lea.vmem [#allocation2], %s544
          %546 = dma.done %s542, 128
        $region56: #{tpu_custom_call.1} parent=51 // pred_fallthru
          _
      $region52: #{tpu_custom_call.1} parent=5 // pred_fallthru
        _
    $region6: #{tpu_custom_call.1} parent=1 // loop_footer
      %s19 = sadd.s32 1, %s15
    $region7: #{tpu_custom_call.1} parent=1 // loop_footer_branch
      %14 = sbr.rel target = $region3
    $region8: #{tpu_custom_call.1} parent=1 // loop_exit
      _
    %547 = vsyncpa [#allocation3], 1
    %s548 = scalar_lea.sflag [#allocation3], 1
    %549 = vsyncpa %s548, 1

</llo_original>
